<compile_context>
chip_gen: v7x
topology: tpu7x:2x2x1
jax: 0.10.0
libtpu: 0.0.40
codegen_flags: <defaults>
</compile_context>

<pallas_src>
import jax
import jax.numpy as jnp
from jax import lax
from jax.experimental import pallas as pl
from jax.experimental.pallas import tpu as pltpu


# --------------------------------------------------------------------------
# helpers
# --------------------------------------------------------------------------
def _cdiv(a, b):
    return (a + b - 1) // b


_LANES = 128                       # lane width (last dim), multiple of 128
_DEFAULT_BLOCK_BYTES = 2 << 20     # ~2 MiB per input block (f32 budget)


def _as_2d(a, lanes):
    """Reshape to (rows, lanes).  Zero-pads (whole-array copy) only when the
    element count is not a multiple of `lanes` -- otherwise it is a free
    bitcast reshape."""
    n = a.size
    rows = _cdiv(n, lanes)
    if n == rows * lanes:
        return a.reshape(rows, lanes), False
    flat = jnp.pad(a.reshape(-1), (0, rows * lanes - n))
    return flat.reshape(rows, lanes), True


def _row_tile(rows, lanes, block_bytes):
    """Row-tile size from a VMEM byte budget (f32 accumulator sizing)."""
    budget_tm = max(8, (block_bytes // (lanes * 4)) // 8 * 8)
    if rows <= budget_tm:
        return rows            # full-dim block: always layout-legal
    return budget_tm           # multiple of 8: always layout-legal


# --------------------------------------------------------------------------
# kernels
# --------------------------------------------------------------------------
def _make_sse_kernel(num_parts, steps, n_blocks, rows, tm):
    """Per-part sum of squared errors.

    grid = (P, S): P parallel parts (megacore), S serial row-tiles per part.
    Static (trace-time) flags decide whether boundary-row masking and
    out-of-range-block skipping code are emitted at all.
    """
    has_oob_blocks = num_parts * steps > n_blocks
    has_partial_block = (rows % tm) != 0

    def kernel(x_ref, t_ref, out_ref, acc_ref):
        p = pl.program_id(0)
        s = pl.program_id(1)

        @pl.when(s == 0)
        def _():
            acc_ref[...] = jnp.zeros_like(acc_ref)

        blk = p * steps + s

        def accumulate():
            d = x_ref[...].astype(jnp.float32) - t_ref[...].astype(jnp.float32)
            sq = d * d
            if has_partial_block:
                # Mask rows past the end of the real data (boundary block).
                row_ids = lax.broadcasted_iota(jnp.int32, (tm, 1), 0) + blk * tm
                sq = jnp.where(row_ids < rows, sq, 0.0)
            acc_ref[...] += sq

        if has_oob_blocks:
            # Parts x steps over-covers the block range by at most one block;
            # the index_map clamps the DMA, the accumulation is simply skipped.
            pl.when(blk < n_blocks)(accumulate)
        else:
            accumulate()

        @pl.when(s == steps - 1)
        def _():
            # Single cross-lane reduce + lane-dense (1,8,128) store per part.
            out_ref[...] = jnp.full(out_ref.shape, jnp.sum(acc_ref[...]),
                                    dtype=out_ref.dtype)

    return kernel


def _sq_err_kernel(x_ref, t_ref, o_ref):
    """Element-wise squared error (reduction='none')."""
    d = x_ref[...].astype(jnp.float32) - t_ref[...].astype(jnp.float32)
    o_ref[...] = d * d


# --------------------------------------------------------------------------
# pallas_call wrappers
# --------------------------------------------------------------------------
def _sse_sum(a, b, *, lanes=_LANES, block_bytes=_DEFAULT_BLOCK_BYTES):
    """Pallas sum((a - b)^2) over all elements. Returns (sse, n_elements)."""
    n = a.size
    a2, _ = _as_2d(a, lanes)
    b2, _ = _as_2d(b, lanes)
    rows = a2.shape[0]

    tm = _row_tile(rows, lanes, block_bytes)
    n_blocks = _cdiv(rows, tm)
    num_parts = 2 if n_blocks >= 2 else 1      # one part per v7x TensorCore
    steps = _cdiv(n_blocks, num_parts)

    last_blk = n_blocks - 1
    clamp = num_parts * steps > n_blocks

    def idx(p, s):
        blk = p * steps + s
        if clamp:
            blk = jnp.minimum(blk, last_blk)   # keep the DMA in bounds
        return (blk, 0)

    kernel = _make_sse_kernel(num_parts, steps, n_blocks, rows, tm)

    out = pl.pallas_call(
        kernel,
        out_shape=jax.ShapeDtypeStruct((num_parts, 8, 128), jnp.float32),
        grid_spec=pltpu.PrefetchScalarGridSpec(
            num_scalar_prefetch=0,
            grid=(num_parts, steps),
            in_specs=[pl.BlockSpec((tm, lanes), idx),
                      pl.BlockSpec((tm, lanes), idx)],
            out_specs=pl.BlockSpec((1, 8, 128), lambda p, s: (p, 0, 0)),
            scratch_shapes=[pltpu.VMEM((tm, lanes), jnp.float32)],
        ),
        compiler_params=pltpu.CompilerParams(
            dimension_semantics=("parallel", "arbitrary")),
    )(a2, b2)

    return jnp.sum(out[:, 0, 0]), n


def _sq_err_none(a, b, *, lanes=_LANES, block_bytes=_DEFAULT_BLOCK_BYTES):
    """Pallas element-wise (a - b)^2 with the original shape."""
    shape = a.shape
    n = a.size
    a2, padded = _as_2d(a, lanes)
    b2, _ = _as_2d(b, lanes)
    rows = a2.shape[0]

    tm = _row_tile(rows, lanes, block_bytes)
    n_blocks = _cdiv(rows, tm)

    out = pl.pallas_call(
        _sq_err_kernel,
        out_shape=jax.ShapeDtypeStruct((rows, lanes), jnp.float32),
        grid_spec=pltpu.PrefetchScalarGridSpec(
            num_scalar_prefetch=0,
            grid=(n_blocks,),
            in_specs=[pl.BlockSpec((tm, lanes), lambda i: (i, 0)),
                      pl.BlockSpec((tm, lanes), lambda i: (i, 0))],
            out_specs=pl.BlockSpec((tm, lanes), lambda i: (i, 0)),
        ),
        compiler_params=pltpu.CompilerParams(
            dimension_semantics=("parallel",)),
    )(a2, b2)

    if padded:
        return out.reshape(-1)[:n].reshape(shape)
    return out.reshape(shape)


def mse_loss(input, target, reduction="mean",
             block_bytes=_DEFAULT_BLOCK_BYTES):
    """Pallas implementation of MSELoss.forward.

    The module's `target.float()` cast happens inside the kernel (both
    operands are promoted to f32 there), so no extra f32 copy of `target`
    is written to HBM.
    """
    if reduction == "none":
        return _sq_err_none(input, target, block_bytes=block_bytes)
    sse, n = _sse_sum(input, target, block_bytes=block_bytes)
    if reduction == "mean":
        return sse / n
    if reduction == "sum":
        return sse
    raise ValueError(f"unknown reduction: {reduction!r}")


# --------------------------------------------------------------------------
# Pure-JAX reference (sanity check)
# --------------------------------------------------------------------------
def mse_loss_ref(input, target, reduction="mean"):
    d = input.astype(jnp.float32) - target.astype(jnp.float32)
    loss = d * d
    if reduction == "mean":
        return jnp.mean(loss)
    if reduction == "sum":
        return jnp.sum(loss)
    return loss


# --------------------------------------------------------------------------
if __name__ == "__main__":
    key = jax.random.PRNGKey(0)
    k1, k2, k3, k4, k5, k6 = jax.random.split(key, 6)

    # small, module-consistent shapes (NCHW)
    N, C, H, W = 2, 4, 16, 16
    x = jax.random.normal(k1, (N, C, H, W), dtype=jnp.float32)
    t = jax.random.normal(k2, (N, C, H, W), dtype=jnp.float32)

    out_mean = mse_loss(x, t, reduction="mean")
    out_sum = mse_loss(x, t, reduction="sum")
    out_none = mse_loss(x, t, reduction="none")

    ref_mean = mse_loss_ref(x, t, "mean")
    ref_sum = mse_loss_ref(x, t, "sum")
    ref_none = mse_loss_ref(x, t, "none")

    # exercises boundary (partial) blocks, OOB-block clamping for the 2-part
    # parallel split, and multi-block serial accumulation (small block budget
    # forces several tiles) -- no padding copy is made here
    x2 = jax.random.normal(k3, (4, 8, 32, 33), dtype=jnp.float32)
    t2 = jax.random.normal(k4, (4, 8, 32, 33), dtype=jnp.float32)
    out_mean2 = mse_loss(x2, t2, reduction="mean", block_bytes=32 << 10)
    out_none2 = mse_loss(x2, t2, reduction="none", block_bytes=32 << 10)
    ref_mean2 = mse_loss_ref(x2, t2, "mean")
    ref_none2 = mse_loss_ref(x2, t2, "none")

    # exercises the rare lane-padding path (element count not a multiple of 128)
    x3 = jax.random.normal(k5, (2, 3, 5, 7), dtype=jnp.float32)
    t3 = jax.random.normal(k6, (2, 3, 5, 7), dtype=jnp.float32)
    out_mean3 = mse_loss(x3, t3, reduction="mean")
    out_none3 = mse_loss(x3, t3, reduction="none")
    ref_mean3 = mse_loss_ref(x3, t3, "mean")
    ref_none3 = mse_loss_ref(x3, t3, "none")

    jax.block_until_ready((out_mean, out_sum, out_none,
                           out_mean2, out_none2, out_mean3, out_none3))

    assert jnp.allclose(out_mean, ref_mean, rtol=1e-5, atol=1e-6), (out_mean, ref_mean)
    assert jnp.allclose(out_sum, ref_sum, rtol=1e-5, atol=1e-4), (out_sum, ref_sum)
    assert jnp.allclose(out_none, ref_none, rtol=1e-5, atol=1e-6)
    assert jnp.allclose(out_mean2, ref_mean2, rtol=1e-5, atol=1e-6), (out_mean2, ref_mean2)
    assert jnp.allclose(out_none2, ref_none2, rtol=1e-5, atol=1e-6)
    assert jnp.allclose(out_mean3, ref_mean3, rtol=1e-5, atol=1e-6), (out_mean3, ref_mean3)
    assert jnp.allclose(out_none3, ref_none3, rtol=1e-5, atol=1e-6)

    print("KERNEL_OK")
</pallas_src>

<mosaic_0001>
module attributes {stable_mosaic.version = 11 : i64} {
  func.func @kernel(%arg0: i32, %arg1: i32, %arg2: memref<16x128xf32, #tpu.memory_space<vmem>>, %arg3: memref<16x128xf32, #tpu.memory_space<vmem>>, %arg4: memref<1x8x128xf32, #tpu.memory_space<vmem>>, %arg5: memref<16x128xf32, #tpu.memory_space<vmem>>) attributes {dimension_semantics = [#tpu.dimension_semantics<parallel>, #tpu.dimension_semantics<arbitrary>], iteration_bounds = array<i64: 1, 1>, scalar_prefetch = 0 : i64, scratch_operands = 1 : i64, tpu.core_type = #tpu.core_type<tc>, window_params = [{transform_indices = @transform_0, window_bounds = array<i64: 16, 128>}, {transform_indices = @transform_1, window_bounds = array<i64: 16, 128>}, {transform_indices = @transform_2, window_bounds = array<i64: 1, 8, 128>}]} {
    %c0_i32 = arith.constant 0 : i32
    %0 = arith.cmpi eq, %arg1, %c0_i32 : i32
    %1 = arith.extui %0 : i1 to i32
    %c0_i32_0 = arith.constant 0 : i32
    %2 = arith.cmpi ne, %1, %c0_i32_0 : i32
    scf.if %2 {
      %cst = arith.constant 0.000000e+00 : f32
      %13 = vector.broadcast %cst : f32 to vector<16x128xf32>
      %c0_10 = arith.constant 0 : index
      %c0_11 = arith.constant 0 : index
      %14 = vector.load %arg5[%c0_10, %c0_11] : memref<16x128xf32, #tpu.memory_space<vmem>>, vector<16x128xf32>
      tpu.vector_store %arg5[%c0_10, %c0_11], %13 {strides = array<i32>} : memref<16x128xf32, #tpu.memory_space<vmem>>, vector<16x128xf32>,
    } else {
    }
    %c0 = arith.constant 0 : index
    %c0_1 = arith.constant 0 : index
    %3 = vector.load %arg2[%c0, %c0_1] : memref<16x128xf32, #tpu.memory_space<vmem>>, vector<16x128xf32>
    %c0_2 = arith.constant 0 : index
    %c0_3 = arith.constant 0 : index
    %4 = vector.load %arg3[%c0_2, %c0_3] : memref<16x128xf32, #tpu.memory_space<vmem>>, vector<16x128xf32>
    %5 = arith.subf %3, %4 : vector<16x128xf32>
    %6 = arith.mulf %5, %5 : vector<16x128xf32>
    %c0_4 = arith.constant 0 : index
    %c0_5 = arith.constant 0 : index
    %7 = vector.load %arg5[%c0_4, %c0_5] : memref<16x128xf32, #tpu.memory_space<vmem>>, vector<16x128xf32>
    %8 = arith.addf %7, %6 : vector<16x128xf32>
    %c0_6 = arith.constant 0 : index
    %c0_7 = arith.constant 0 : index
    %9 = vector.load %arg5[%c0_6, %c0_7] : memref<16x128xf32, #tpu.memory_space<vmem>>, vector<16x128xf32>
    tpu.vector_store %arg5[%c0_6, %c0_7], %8 {strides = array<i32>} : memref<16x128xf32, #tpu.memory_space<vmem>>, vector<16x128xf32>,
    %c0_i32_8 = arith.constant 0 : i32
    %10 = arith.cmpi eq, %arg1, %c0_i32_8 : i32
    %11 = arith.extui %10 : i1 to i32
    %c0_i32_9 = arith.constant 0 : i32
    %12 = arith.cmpi ne, %11, %c0_i32_9 : i32
    scf.if %12 {
      %c0_10 = arith.constant 0 : index
      %c0_11 = arith.constant 0 : index
      %13 = vector.load %arg5[%c0_10, %c0_11] : memref<16x128xf32, #tpu.memory_space<vmem>>, vector<16x128xf32>
      %14 = vector.shape_cast %13 : vector<16x128xf32> to vector<1x16x128xf32>
      %cst = arith.constant dense<0.000000e+00> : vector<1xf32>
      %15 = vector.multi_reduction <add>, %14, %cst [1, 2] : vector<1x16x128xf32> to vector<1xf32>
      %16 = vector.shape_cast %15 : vector<1xf32> to vector<1x1x1xf32>
      %17 = vector.extract %16[0, 0, 0] : f32 from vector<1x1x1xf32>
      %18 = vector.broadcast %17 : f32 to vector<1x8x128xf32>
      %c0_12 = arith.constant 0 : index
      %c0_13 = arith.constant 0 : index
      %c0_14 = arith.constant 0 : index
      %19 = vector.load %arg4[%c0_12, %c0_13, %c0_14] : memref<1x8x128xf32, #tpu.memory_space<vmem>>, vector<1x8x128xf32>
      tpu.vector_store %arg4[%c0_12, %c0_13, %c0_14], %18 {strides = array<i32>} : memref<1x8x128xf32, #tpu.memory_space<vmem>>, vector<1x8x128xf32>,
    } else {
    }
    return
  }
  func.func @transform_0(%arg0: i32, %arg1: i32) -> (i32, i32) {
    %c1_i32 = arith.constant 1 : i32
    %0 = arith.muli %arg0, %c1_i32 : i32
    %1 = arith.addi %0, %arg1 : i32
    %c0_i32 = arith.constant 0 : i32
    %c0_i32_0 = arith.constant 0 : i32
    return %1, %c0_i32 : i32, i32
  }
  func.func @transform_1(%arg0: i32, %arg1: i32) -> (i32, i32) {
    %c1_i32 = arith.constant 1 : i32
    %0 = arith.muli %arg0, %c1_i32 : i32
    %1 = arith.addi %0, %arg1 : i32
    %c0_i32 = arith.constant 0 : i32
    %c0_i32_0 = arith.constant 0 : i32
    return %1, %c0_i32 : i32, i32
  }
  func.func @transform_2(%arg0: i32, %arg1: i32) -> (i32, i32, i32) {
    %c0_i32 = arith.constant 0 : i32
    %c0_i32_0 = arith.constant 0 : i32
    %c0_i32_1 = arith.constant 0 : i32
    return %arg0, %c0_i32, %c0_i32_0 : i32, i32, i32
  }
}

</mosaic_0001>

<llo_original>
// kernel: tpu_custom_call.1
$region0: #{tpu_custom_call.1}
  #allocation0 [shape = 'u32[]', space=smem, size = 0x4, offset = 0x4, fixed_abs, tag = 'smem constant byte address 0x4 - core index']
  #allocation1 [shape = 'u32[144,128]{1,0:T(1,128)}', space=vmem, size = 0x12000, scoped, tag = 'internal scratch']
  #allocation2 [shape = 'f32[16,128]{1,0:T(8,128)}', space=vmem, size = 0x2000, scoped, tag = 'scratch operand']
  %s0 = inlined_call_operand.hbm [shape: f32[16,128], index: 0, kind: input, shape index: {}]
  %s1 = inlined_call_operand.hbm [shape: f32[16,128], index: 1, kind: input, shape index: {}]
  %s2 = inlined_call_operand.hbm [shape: f32[1,8,128], index: 2, kind: output, shape index: {}]
  %s3 = sld [smem:[#allocation0]]
  $region34: #{tpu_custom_call.1} parent=0
    _
  %s5 = ssub.s32 1, %s3
  %s6 = scalar_select 0, %s5, %s3
  $region1: #{tpu_custom_call.1} parent=0
    #allocation3 [shape = 'u8[8192]{0}', space=vmem, size = 0x2000, scoped, tag = 'input window, operand 0, single buffered']
    #allocation4 [shape = 's32[1]{0}', space=sflag, size = 0x4, scoped, tag = 'scoped memory for tpu_custom_call.1']
    #allocation5 [shape = 's32[1]{0}', space=sflag, size = 0x4, scoped, tag = 'scoped memory for tpu_custom_call.1']
    #allocation6 [shape = 'u8[8192]{0}', space=vmem, size = 0x2000, scoped, tag = 'input window, operand 1, single buffered']
    #allocation7 [shape = 's32[1]{0}', space=sflag, size = 0x4, scoped, tag = 'scoped memory for tpu_custom_call.1']
    #allocation8 [shape = 'u8[4096]{0}', space=vmem, size = 0x1000, scoped, tag = 'output window, operand 0, single buffered']
    %7 = vsyncpa [#allocation4], 0
    %8 = vsyncpa [#allocation7], 0
    %9 = vsyncpa [#allocation5], 0
    // Predicated region
    $region2: #{tpu_custom_call.1} parent=1 // pred_check
      _
    $region3: #{tpu_custom_call.1} parent=1 // pred_check_branch
      %11 = sbr.rel (0) target = $region5
    $region4: #{tpu_custom_call.1} parent=1 // pred_region
      %s12 = sadd.s32 0, 0
      %s13 = smul.u32 2, %s12
      %s15 = ssub.s32 256, 256
      %16 = vsyncadd [#allocation4], %s15
      %s17 = smul.addr %s13, 128
      %s18 = scalar_lea.hbm %s0, %s17
      %s19 = sshll.u32 [#allocation3], 4
      %s20 = int_to_ptr.vmem [resolvable:$true] %s19
      %25 = dma.hbm_to_vmem [thread:$0]  %s18, 256, %s20, [#allocation4], 128, 128, 8
    $region5: #{tpu_custom_call.1} parent=1 // pred_fallthru
      _
    // Predicated region
    $region6: #{tpu_custom_call.1} parent=1 // pred_check
      _
    $region7: #{tpu_custom_call.1} parent=1 // pred_check_branch
      %27 = sbr.rel (0) target = $region9
    $region8: #{tpu_custom_call.1} parent=1 // pred_region
      %s28 = sadd.s32 0, 0
      %s29 = smul.u32 2, %s28
      %s31 = ssub.s32 256, 256
      %32 = vsyncadd [#allocation7], %s31
      %s33 = smul.addr %s29, 128
      %s34 = scalar_lea.hbm %s1, %s33
      %s35 = sshll.u32 [#allocation6], 4
      %s36 = int_to_ptr.vmem [resolvable:$true] %s35
      %41 = dma.hbm_to_vmem [thread:$0]  %s34, 256, %s36, [#allocation7], 128, 128, 8
    $region9: #{tpu_custom_call.1} parent=1 // pred_fallthru
      _
    // Predicated region
    $region10: #{tpu_custom_call.1} parent=1 // pred_check
      _
    $region11: #{tpu_custom_call.1} parent=1 // pred_check_branch
      %43 = sbr.rel (0) target = $region13
    $region12: #{tpu_custom_call.1} parent=1 // pred_region
      %44 = dma.done [#allocation4], 256
    $region13: #{tpu_custom_call.1} parent=1 // pred_fallthru
      _
    // Predicated region
    $region14: #{tpu_custom_call.1} parent=1 // pred_check
      _
    $region15: #{tpu_custom_call.1} parent=1 // pred_check_branch
      %46 = sbr.rel (0) target = $region17
    $region16: #{tpu_custom_call.1} parent=1 // pred_region
      %47 = dma.done [#allocation7], 256
    $region17: #{tpu_custom_call.1} parent=1 // pred_fallthru
      _
    %s48 = sadd.s32 0, 0
    %s49 = smul.u32 2, %s48
    %s50 = sadd.s32 0, 0
    %s51 = smul.u32 2, %s50
    %p52 = scmp.eq.s32.totalorder 0, 0
    // Predicated region
    $region18: #{tpu_custom_call.1} parent=1 // pred_check
      %p53 = pneg %p52
    $region19: #{tpu_custom_call.1} parent=1 // pred_check_branch
      %55 = sbr.rel (%p53) target = $region21
    $region20: #{tpu_custom_call.1} parent=1 // pred_region
      %56 = vst [vmem:[#allocation2] sm:$0xff] 0.0
      %57 = vst [vmem:[#allocation2 + $0x8] sm:$0xff] 0.0
    $region21: #{tpu_custom_call.1} parent=1 // pred_fallthru
      _
    %v58 = vld [vmem:[#allocation3] sm:$0xff]
    %v59 = vld [vmem:[#allocation3 + $0x8] sm:$0xff]
    %v60 = vld [vmem:[#allocation6] sm:$0xff]
    %v61 = vld [vmem:[#allocation6 + $0x8] sm:$0xff]
    %v62 = vsub.f32 %v58, %v60
    %v63 = vsub.f32 %v59, %v61
    %v64 = vmul.f32 %v62, %v62
    %v65 = vmul.f32 %v63, %v63
    %v66 = vld [vmem:[#allocation2] sm:$0xff]
    %v67 = vld [vmem:[#allocation2 + $0x8] sm:$0xff]
    %v68 = vadd.f32 %v66, %v64
    %v69 = vadd.f32 %v67, %v65
    %70 = vst [vmem:[#allocation2] sm:$0xff] %v68
    %71 = vst [vmem:[#allocation2 + $0x8] sm:$0xff] %v69
    // Predicated region
    $region22: #{tpu_custom_call.1} parent=1 // pred_check
      %p72 = pneg %p52
    $region23: #{tpu_custom_call.1} parent=1 // pred_check_branch
      %74 = sbr.rel (%p72) target = $region25
    $region24: #{tpu_custom_call.1} parent=1 // pred_region
      %v75 = vld [vmem:[#allocation2] sm:$0xff]
      %v76 = vld [vmem:[#allocation2 + $0x8] sm:$0xff]
      %v77 = vadd.f32 %v75, %v76
      %78 = vadd.xlane.f32.xlu0 %v77
      %v79 = vpop.xlane.xlu0 %78
      %v80 = vrot.slane %v79, 4
      %v81 = vadd.f32 %v79, %v80
      %v82 = vrot.slane %v81, 2
      %v83 = vadd.f32 %v81, %v82
      %v84 = vrot.slane %v83, 1
      %v85 = vadd.f32 %v83, %v84
      %s86 = vtos %v85
      %v87 = vstv %s86
      %88 = vst [vmem:[#allocation8] sm:$0xff] %v87
    $region25: #{tpu_custom_call.1} parent=1 // pred_fallthru
      _
    // Predicated region
    $region26: #{tpu_custom_call.1} parent=1 // pred_check
      _
    $region27: #{tpu_custom_call.1} parent=1 // pred_check_branch
      %90 = sbr.rel (0) target = $region29
    $region28: #{tpu_custom_call.1} parent=1 // pred_region
      %s92 = ssub.s32 128, 128
      %93 = vsyncadd [#allocation5], %s92
      %s95 = sshll.u32 [#allocation8], 4
      %s96 = int_to_ptr.vmem [resolvable:$true] %s95
      %98 = dma.vmem_to_hbm [thread:$0]  %s96, 128, %s2, [#allocation5]
    $region29: #{tpu_custom_call.1} parent=1 // pred_fallthru
      _
    // Predicated region
    $region30: #{tpu_custom_call.1} parent=1 // pred_check
      _
    $region31: #{tpu_custom_call.1} parent=1 // pred_check_branch
      %100 = sbr.rel (0) target = $region33
    $region32: #{tpu_custom_call.1} parent=1 // pred_region
      %101 = dma.done [#allocation5], 128
    $region33: #{tpu_custom_call.1} parent=1 // pred_fallthru
      _
    %102 = vsyncpa [#allocation4], 1
    %103 = vsyncpa [#allocation7], 1
    %104 = vsyncpa [#allocation5], 1

</llo_original>
